<compile_context>
chip_gen: v6e
topology: v6e:2x2x1
jax: 0.10.0
libtpu: 0.0.40
codegen_flags: <defaults>
</compile_context>

<pallas_src>
import functools
import math

import jax
import jax.numpy as jnp
from jax.experimental import pallas as pl
from jax.experimental.pallas import tpu as pltpu


def _round_up(x, m):
    return (x + m - 1) // m * m


def _cdiv(a, b):
    return -(-a // b)


# ----------------------------------------------------------------------------
# Fused kernel: first_linear + interleaved cross/deep towers + last_linear for
# one batch tile.  All matmul weights are (in, out) layout, bf16, lane-padded.
# ----------------------------------------------------------------------------
def dcnv2_kernel(x_ref,                      # (TB, d_in_pad)            bf16
                 wf_ref, bf_ref,             # (d_in_pad, d_pad) bf16, (1, d_pad) f32
                 wc_ref, bc_ref,             # (n_cross, d_pad, d_pad) bf16, (n_cross, 1, d_pad) f32
                 wd_ref, bd_ref,             # (n_hidden, d_pad, d_pad) bf16, (n_hidden, 1, d_pad) f32
                 wl_ref, bl_ref,             # (2, d_pad, do_pad) bf16, (1, do_pad) f32
                 o_ref,                      # (TB, do_pad)               f32
                 *, n_cross, n_hidden):
    def mm(x, w):
        # (M, K) @ (K, N): bf16 operands, f32 accumulation on the MXU.
        return jax.lax.dot_general(
            x.astype(w.dtype), w,
            dimension_numbers=(((1,), (0,)), ((), ())),
            preferred_element_type=jnp.float32)

    # first_linear over the (already concatenated, lane-padded) input block
    x0 = mm(x_ref[...], wf_ref[...]) + bf_ref[...]

    # cross & deep towers are independent after x0 -> interleave them so two
    # MXU dependency chains are in flight (hides MRF/result-FIFO latency).
    xc = x0
    xd = x0
    n_common = min(n_cross, n_hidden)
    for i in range(n_common):
        pc = mm(xc, wc_ref[i])
        pd = mm(xd, wd_ref[i])
        xc = x0 * (pc + bc_ref[i]) + xc          # dropout = identity (eval)
        xd = jnp.maximum(pd + bd_ref[i], 0.0)    # ReLU; dropout = identity
    for i in range(n_common, n_cross):
        xc = x0 * (mm(xc, wc_ref[i]) + bc_ref[i]) + xc
    for i in range(n_common, n_hidden):
        xd = jnp.maximum(mm(xd, wd_ref[i]) + bd_ref[i], 0.0)

    # last_linear over concat([xc, xd], 1); weight pre-split & stacked (2,...)
    out = mm(xc, wl_ref[0]) + mm(xd, wl_ref[1]) + bl_ref[...]
    o_ref[...] = out.astype(o_ref.dtype)


# ----------------------------------------------------------------------------
# One-time weight re-layout (hoisted out of the per-call forward path).
# ----------------------------------------------------------------------------
def prepare_params(params, *, d_num, categories, compute_dtype=jnp.bfloat16):
    d = params["wf"].shape[0]
    d_out = params["wl"].shape[0]
    d_emb = params["emb"].shape[1]
    d_in = d_num + len(categories) * d_emb
    assert params["wf"].shape[1] == d_in

    d_pad = _round_up(d, 128)
    d_in_pad = _round_up(d_in, 128)
    do_pad = _round_up(d_out, 128)

    def pad2(a, rows, cols):
        return jnp.pad(a, ((0, rows - a.shape[0]), (0, cols - a.shape[1])))

    cdt = compute_dtype
    wf = pad2(params["wf"].T, d_in_pad, d_pad).astype(cdt)          # (d_in_pad, d_pad)
    bf = pad2(params["bf"], 1, d_pad).astype(jnp.float32)           # (1, d_pad)

    wc = jnp.transpose(params["wc"], (0, 2, 1))                     # (n_cross, d, d)
    wc = jnp.pad(wc, ((0, 0), (0, d_pad - d), (0, d_pad - d))).astype(cdt)
    bc = jnp.pad(params["bc"], ((0, 0), (0, 0), (0, d_pad - d))).astype(jnp.float32)
    wd = jnp.transpose(params["wd"], (0, 2, 1))                     # (n_hidden, d, d)
    wd = jnp.pad(wd, ((0, 0), (0, d_pad - d), (0, d_pad - d))).astype(cdt)
    bd = jnp.pad(params["bd"], ((0, 0), (0, 0), (0, d_pad - d))).astype(jnp.float32)

    wl = params["wl"]                                               # (d_out, 2d)
    wlc = pad2(wl[:, :d].T, d_pad, do_pad)                          # cross half
    wld = pad2(wl[:, d:].T, d_pad, do_pad)                          # deep half
    wl2 = jnp.stack([wlc, wld]).astype(cdt)                         # (2, d_pad, do_pad)
    bl = pad2(params["bl"], 1, do_pad).astype(jnp.float32)          # (1, do_pad)

    offs = [0]
    for c in categories[:-1]:
        offs.append(offs[-1] + c)
    offsets = jnp.asarray(offs, jnp.int32)

    return dict(emb=params["emb"], offsets=offsets,
                wf=wf, bf=bf, wc=wc, bc=bc, wd=wd, bd=bd, wl=wl2, bl=bl,
                d=d, d_out=d_out, d_num=d_num, d_in=d_in,
                d_pad=d_pad, d_in_pad=d_in_pad, do_pad=do_pad,
                n_cross=int(params["wc"].shape[0]),
                n_hidden=int(params["wd"].shape[0]),
                compute_dtype=cdt)


# ----------------------------------------------------------------------------
# Forward wrapper: embedding gather + batch tiling glue, hot path in Pallas.
# ----------------------------------------------------------------------------
def dcnv2_forward(prep, x_num, x_cat, *, tile_b=None):
    B, d_num = x_num.shape
    assert d_num == prep["d_num"]
    d_in, d_in_pad = prep["d_in"], prep["d_in_pad"]
    d_pad, do_pad, d_out = prep["d_pad"], prep["do_pad"], prep["d_out"]
    n_cross, n_hidden = prep["n_cross"], prep["n_hidden"]
    cdt = prep["compute_dtype"]

    # categorical embedding gather (data-dependent gather stays in JAX)
    # TODO(synk): fuse the gather in-kernel (scalar-prefetch x_cat + manual DMA
    # gather on an HBM emb table) to avoid the emb round-trip through HBM.
    emb = jnp.take(prep["emb"], x_cat + prep["offsets"][None], axis=0).reshape(B, -1)

    # single lane-dense input block: concat once + pad feature dim to 128-mult
    x = jnp.concatenate([x_num, emb], axis=-1)                      # (B, d_in) f32

    # batch tiling: multiples of 16 (bf16 sublane packing)
    if tile_b is None:
        b16 = _round_up(max(B, 16), 16)
        if b16 <= 512:
            tile_b = b16
        else:
            n_tiles = max(2, _cdiv(b16, 1024))   # >=2 steps -> v7x megacore
            tile_b = _round_up(_cdiv(b16, n_tiles), 16)
    else:
        tile_b = _round_up(tile_b, 16)
    B_pad = _round_up(B, tile_b)

    x = jnp.pad(x, ((0, B_pad - B), (0, d_in_pad - d_in))).astype(cdt)
    grid = (B_pad // tile_b,)

    # weights stay VMEM-resident across grid steps (constant block index)
    # TODO(synk): single-buffer the pinned weight inputs (pl.Buffered(1)) to
    # halve their VMEM footprint on v7x once that path is validated.
    def pinned(a):
        return pl.BlockSpec(a.shape, lambda *_: (0,) * a.ndim)

    weights = (prep["wf"], prep["bf"], prep["wc"], prep["bc"],
               prep["wd"], prep["bd"], prep["wl"], prep["bl"])

    kernel = functools.partial(dcnv2_kernel, n_cross=n_cross, n_hidden=n_hidden)

    # VMEM budget: pinned weights are double-buffered by Pallas (2x), streaming
    # act/out blocks double-buffered, plus live f32 intermediates.
    weight_bytes = sum(int(a.size) * a.dtype.itemsize for a in weights)
    stream_bytes = 2 * (tile_b * d_in_pad * 2 + tile_b * do_pad * 4)
    live_bytes = 8 * tile_b * d_pad * 4
    need = 2 * weight_bytes + stream_bytes + live_bytes
    try:
        phys = int(getattr(pltpu.get_tpu_info(), "vmem_capacity_bytes", 64 << 20))
    except Exception:
        phys = 64 << 20
    cap = max(phys * 3 // 4, 32 << 20)           # ~96 MiB v5e/v6e, <=48 MiB v7x
    vmem_limit = int(min(max(2 * need, 16 << 20), cap))

    out = pl.pallas_call(
        kernel,
        out_shape=jax.ShapeDtypeStruct((B_pad, do_pad), jnp.float32),
        grid=grid,
        in_specs=[pl.BlockSpec((tile_b, d_in_pad), lambda i: (i, 0))] +
                 [pinned(a) for a in weights],
        out_specs=pl.BlockSpec((tile_b, do_pad), lambda i: (i, 0)),
        compiler_params=pltpu.CompilerParams(
            dimension_semantics=("parallel",),
            vmem_limit_bytes=vmem_limit),
    )(x, *weights)

    out = out[:B, :d_out]
    if d_out == 1:
        out = out[:, 0]            # .squeeze(1) of the PyTorch module
    return out


# ----------------------------------------------------------------------------
# Deterministic parameter construction (PyTorch-Linear-style uniform init)
# ----------------------------------------------------------------------------
def init_linear(key, out_f, in_f):
    k1, k2 = jax.random.split(key)
    bound = 1.0 / math.sqrt(in_f)
    w = jax.random.uniform(k1, (out_f, in_f), jnp.float32, -bound, bound)
    b = jax.random.uniform(k2, (1, out_f), jnp.float32, -bound, bound)
    return w, b


def make_params(key, *, d_in, d, n_cross, n_hidden, d_out, n_emb_rows, d_emb):
    keys = jax.random.split(key, 4 + n_cross + n_hidden)
    ki = iter(keys)

    emb_bound = math.sqrt(1.0 / d_emb)   # kaiming_uniform(a=sqrt(5)) on fan_in=d_emb
    emb = jax.random.uniform(next(ki), (n_emb_rows, d_emb), jnp.float32,
                             -emb_bound, emb_bound)

    wf, bf = init_linear(next(ki), d, d_in)

    wc_l, bc_l = [], []
    for _ in range(n_cross):
        w, b = init_linear(next(ki), d, d)
        wc_l.append(w); bc_l.append(b)
    wd_l, bd_l = [], []
    for _ in range(n_hidden):
        w, b = init_linear(next(ki), d, d)
        wd_l.append(w); bd_l.append(b)

    wl, bl = init_linear(next(ki), d_out, 2 * d)   # stacked=False -> 2*d input

    return dict(
        emb=emb,
        wf=wf, bf=bf,
        wc=jnp.stack(wc_l), bc=jnp.stack(bc_l),
        wd=jnp.stack(wd_l), bd=jnp.stack(bd_l),
        wl=wl, bl=bl,
    )


# ----------------------------------------------------------------------------
# Pure-JAX reference with the same bf16-MXU / f32-accumulation numerics.
# ----------------------------------------------------------------------------
def dcnv2_ref(params, x_num, x_cat, *, categories, mxu_dtype=jnp.bfloat16):
    B = x_num.shape[0]
    offs = [0]
    for c in categories[:-1]:
        offs.append(offs[-1] + c)
    offsets = jnp.asarray(offs, jnp.int32)
    emb = jnp.take(params["emb"], x_cat + offsets[None], axis=0)
    x = jnp.concatenate([x_num, emb.reshape(B, -1)], axis=-1)

    def mm(a, w):   # w in PyTorch (out, in) layout
        return jax.lax.dot_general(a.astype(mxu_dtype), w.astype(mxu_dtype),
                                   (((1,), (1,)), ((), ())),
                                   preferred_element_type=jnp.float32)

    x0 = mm(x, params["wf"]) + params["bf"][0]
    xc = x0
    for i in range(params["wc"].shape[0]):
        xc = x0 * (mm(xc, params["wc"][i]) + params["bc"][i, 0]) + xc
    xd = x0
    for i in range(params["wd"].shape[0]):
        xd = jnp.maximum(mm(xd, params["wd"][i]) + params["bd"][i, 0], 0.0)
    cat = jnp.concatenate([xc, xd], axis=1)
    out = mm(cat, params["wl"]) + params["bl"][0]
    return out[:, 0] if params["wl"].shape[0] == 1 else out


if __name__ == "__main__":
    # Small synthetic config consistent with the module's __init__
    B = 8
    d_num = 4
    categories = [3, 5, 7]
    d_embedding = 4
    d = 32
    n_hidden_layers = 2
    n_cross_layers = 2
    d_out = 1
    d_in = d_num + len(categories) * d_embedding   # 16

    key = jax.random.PRNGKey(0)
    kp, kx, kc, kx2, kc2 = jax.random.split(key, 5)

    params = make_params(kp, d_in=d_in, d=d, n_cross=n_cross_layers,
                         n_hidden=n_hidden_layers, d_out=d_out,
                         n_emb_rows=sum(categories), d_emb=d_embedding)
    prep = prepare_params(params, d_num=d_num, categories=categories)

    x_num = jax.random.normal(kx, (B, d_num), jnp.float32)
    cat_keys = jax.random.split(kc, len(categories))
    x_cat = jnp.stack(
        [jax.random.randint(cat_keys[j], (B,), 0, categories[j], jnp.int32)
         for j in range(len(categories))], axis=1)

    out = dcnv2_forward(prep, x_num, x_cat)
    out = jax.block_until_ready(out)
    ref = dcnv2_ref(params, x_num, x_cat, categories=categories)
    assert out.shape == (B,), out.shape
    assert jnp.allclose(out, ref, rtol=1e-2, atol=1e-2), (out, ref)

    # Exercise the multi-tile grid + batch padding path.
    B2 = 300
    x_num2 = jax.random.normal(kx2, (B2, d_num), jnp.float32)
    cat_keys2 = jax.random.split(kc2, len(categories))
    x_cat2 = jnp.stack(
        [jax.random.randint(cat_keys2[j], (B2,), 0, categories[j], jnp.int32)
         for j in range(len(categories))], axis=1)
    out2 = dcnv2_forward(prep, x_num2, x_cat2, tile_b=128)
    out2 = jax.block_until_ready(out2)
    ref2 = dcnv2_ref(params, x_num2, x_cat2, categories=categories)
    assert out2.shape == (B2,), out2.shape
    assert jnp.allclose(out2, ref2, rtol=1e-2, atol=1e-2), (out2, ref2)

    print("KERNEL_OK")
</pallas_src>

<mosaic_0001>
module attributes {stable_mosaic.version = 11 : i64} {
  func.func @dcnv2_kernel(%arg0: i32, %arg1: memref<16x128xbf16, #tpu.memory_space<vmem>>, %arg2: memref<128x128xbf16, #tpu.memory_space<vmem>>, %arg3: memref<1x128xf32, #tpu.memory_space<vmem>>, %arg4: memref<2x128x128xbf16, #tpu.memory_space<vmem>>, %arg5: memref<2x1x128xf32, #tpu.memory_space<vmem>>, %arg6: memref<2x128x128xbf16, #tpu.memory_space<vmem>>, %arg7: memref<2x1x128xf32, #tpu.memory_space<vmem>>, %arg8: memref<2x128x128xbf16, #tpu.memory_space<vmem>>, %arg9: memref<1x128xf32, #tpu.memory_space<vmem>>, %arg10: memref<16x128xf32, #tpu.memory_space<vmem>>) attributes {dimension_semantics = [#tpu.dimension_semantics<parallel>], iteration_bounds = array<i64: 1>, scalar_prefetch = 0 : i64, scratch_operands = 0 : i64, tpu.core_type = #tpu.core_type<tc>, window_params = [{transform_indices = @transform_0, window_bounds = array<i64: 16, 128>}, {pipeline_mode = #tpu.pipeline_mode<synchronous>, transform_indices = @transform_1, window_bounds = array<i64: 128, 128>}, {pipeline_mode = #tpu.pipeline_mode<synchronous>, transform_indices = @transform_2, window_bounds = array<i64: 1, 128>}, {pipeline_mode = #tpu.pipeline_mode<synchronous>, transform_indices = @transform_3, window_bounds = array<i64: 2, 128, 128>}, {pipeline_mode = #tpu.pipeline_mode<synchronous>, transform_indices = @transform_4, window_bounds = array<i64: 2, 1, 128>}, {pipeline_mode = #tpu.pipeline_mode<synchronous>, transform_indices = @transform_5, window_bounds = array<i64: 2, 128, 128>}, {pipeline_mode = #tpu.pipeline_mode<synchronous>, transform_indices = @transform_6, window_bounds = array<i64: 2, 1, 128>}, {pipeline_mode = #tpu.pipeline_mode<synchronous>, transform_indices = @transform_7, window_bounds = array<i64: 2, 128, 128>}, {pipeline_mode = #tpu.pipeline_mode<synchronous>, transform_indices = @transform_8, window_bounds = array<i64: 1, 128>}, {transform_indices = @transform_9, window_bounds = array<i64: 16, 128>}]} {
    %c0 = arith.constant 0 : index
    %c0_0 = arith.constant 0 : index
    %0 = vector.load %arg1[%c0, %c0_0] : memref<16x128xbf16, #tpu.memory_space<vmem>>, vector<16x128xbf16>
    %c0_1 = arith.constant 0 : index
    %c0_2 = arith.constant 0 : index
    %1 = vector.load %arg2[%c0_1, %c0_2] : memref<128x128xbf16, #tpu.memory_space<vmem>>, vector<128x128xbf16>
    %cst = arith.constant dense<0.000000e+00> : vector<16x128xf32>
    %2 = tpu.matmul %0, %1, %cst {dimension_numbers = #tpu.dot_dimension_numbers<[1], [0], [0], [1], [0, 0, 1, 1], [], []>} : vector<16x128xbf16>, vector<128x128xbf16>, vector<16x128xf32> -> vector<16x128xf32>
    %c0_3 = arith.constant 0 : index
    %c0_4 = arith.constant 0 : index
    %3 = vector.load %arg3[%c0_3, %c0_4] : memref<1x128xf32, #tpu.memory_space<vmem>>, vector<1x128xf32>
    %4 = vector.broadcast %3 : vector<1x128xf32> to vector<16x128xf32>
    %5 = arith.addf %2, %4 : vector<16x128xf32>
    %c0_5 = arith.constant 0 : index
    %c0_6 = arith.constant 0 : index
    %c0_7 = arith.constant 0 : index
    %6 = vector.load %arg4[%c0_5, %c0_6, %c0_7] : memref<2x128x128xbf16, #tpu.memory_space<vmem>>, vector<1x128x128xbf16>
    %7 = vector.shape_cast %6 : vector<1x128x128xbf16> to vector<128x128xbf16>
    %8 = arith.truncf %5 : vector<16x128xf32> to vector<16x128xbf16>
    %cst_8 = arith.constant dense<0.000000e+00> : vector<16x128xf32>
    %9 = tpu.matmul %8, %7, %cst_8 {dimension_numbers = #tpu.dot_dimension_numbers<[1], [0], [0], [1], [0, 0, 1, 1], [], []>} : vector<16x128xbf16>, vector<128x128xbf16>, vector<16x128xf32> -> vector<16x128xf32>
    %c0_9 = arith.constant 0 : index
    %c0_10 = arith.constant 0 : index
    %c0_11 = arith.constant 0 : index
    %10 = vector.load %arg6[%c0_9, %c0_10, %c0_11] : memref<2x128x128xbf16, #tpu.memory_space<vmem>>, vector<1x128x128xbf16>
    %11 = vector.shape_cast %10 : vector<1x128x128xbf16> to vector<128x128xbf16>
    %12 = arith.truncf %5 : vector<16x128xf32> to vector<16x128xbf16>
    %cst_12 = arith.constant dense<0.000000e+00> : vector<16x128xf32>
    %13 = tpu.matmul %12, %11, %cst_12 {dimension_numbers = #tpu.dot_dimension_numbers<[1], [0], [0], [1], [0, 0, 1, 1], [], []>} : vector<16x128xbf16>, vector<128x128xbf16>, vector<16x128xf32> -> vector<16x128xf32>
    %c0_13 = arith.constant 0 : index
    %c0_14 = arith.constant 0 : index
    %c0_15 = arith.constant 0 : index
    %14 = vector.load %arg5[%c0_13, %c0_14, %c0_15] : memref<2x1x128xf32, #tpu.memory_space<vmem>>, vector<1x1x128xf32>
    %15 = vector.shape_cast %14 : vector<1x1x128xf32> to vector<1x128xf32>
    %16 = vector.broadcast %15 : vector<1x128xf32> to vector<16x128xf32>
    %17 = arith.addf %9, %16 : vector<16x128xf32>
    %18 = arith.mulf %5, %17 : vector<16x128xf32>
    %19 = arith.addf %18, %5 : vector<16x128xf32>
    %c0_16 = arith.constant 0 : index
    %c0_17 = arith.constant 0 : index
    %c0_18 = arith.constant 0 : index
    %20 = vector.load %arg7[%c0_16, %c0_17, %c0_18] : memref<2x1x128xf32, #tpu.memory_space<vmem>>, vector<1x1x128xf32>
    %21 = vector.shape_cast %20 : vector<1x1x128xf32> to vector<1x128xf32>
    %22 = vector.broadcast %21 : vector<1x128xf32> to vector<16x128xf32>
    %23 = arith.addf %13, %22 : vector<16x128xf32>
    %cst_19 = arith.constant 0.000000e+00 : f32
    %24 = vector.broadcast %cst_19 : f32 to vector<16x128xf32>
    %25 = arith.maximumf %23, %24 : vector<16x128xf32>
    %c1 = arith.constant 1 : index
    %c0_20 = arith.constant 0 : index
    %c0_21 = arith.constant 0 : index
    %26 = vector.load %arg4[%c1, %c0_20, %c0_21] : memref<2x128x128xbf16, #tpu.memory_space<vmem>>, vector<1x128x128xbf16>
    %27 = vector.shape_cast %26 : vector<1x128x128xbf16> to vector<128x128xbf16>
    %28 = arith.truncf %19 : vector<16x128xf32> to vector<16x128xbf16>
    %cst_22 = arith.constant dense<0.000000e+00> : vector<16x128xf32>
    %29 = tpu.matmul %28, %27, %cst_22 {dimension_numbers = #tpu.dot_dimension_numbers<[1], [0], [0], [1], [0, 0, 1, 1], [], []>} : vector<16x128xbf16>, vector<128x128xbf16>, vector<16x128xf32> -> vector<16x128xf32>
    %c1_23 = arith.constant 1 : index
    %c0_24 = arith.constant 0 : index
    %c0_25 = arith.constant 0 : index
    %30 = vector.load %arg6[%c1_23, %c0_24, %c0_25] : memref<2x128x128xbf16, #tpu.memory_space<vmem>>, vector<1x128x128xbf16>
    %31 = vector.shape_cast %30 : vector<1x128x128xbf16> to vector<128x128xbf16>
    %32 = arith.truncf %25 : vector<16x128xf32> to vector<16x128xbf16>
    %cst_26 = arith.constant dense<0.000000e+00> : vector<16x128xf32>
    %33 = tpu.matmul %32, %31, %cst_26 {dimension_numbers = #tpu.dot_dimension_numbers<[1], [0], [0], [1], [0, 0, 1, 1], [], []>} : vector<16x128xbf16>, vector<128x128xbf16>, vector<16x128xf32> -> vector<16x128xf32>
    %c1_27 = arith.constant 1 : index
    %c0_28 = arith.constant 0 : index
    %c0_29 = arith.constant 0 : index
    %34 = vector.load %arg5[%c1_27, %c0_28, %c0_29] : memref<2x1x128xf32, #tpu.memory_space<vmem>>, vector<1x1x128xf32>
    %35 = vector.shape_cast %34 : vector<1x1x128xf32> to vector<1x128xf32>
    %36 = vector.broadcast %35 : vector<1x128xf32> to vector<16x128xf32>
    %37 = arith.addf %29, %36 : vector<16x128xf32>
    %38 = arith.mulf %5, %37 : vector<16x128xf32>
    %39 = arith.addf %38, %19 : vector<16x128xf32>
    %c1_30 = arith.constant 1 : index
    %c0_31 = arith.constant 0 : index
    %c0_32 = arith.constant 0 : index
    %40 = vector.load %arg7[%c1_30, %c0_31, %c0_32] : memref<2x1x128xf32, #tpu.memory_space<vmem>>, vector<1x1x128xf32>
    %41 = vector.shape_cast %40 : vector<1x1x128xf32> to vector<1x128xf32>
    %42 = vector.broadcast %41 : vector<1x128xf32> to vector<16x128xf32>
    %43 = arith.addf %33, %42 : vector<16x128xf32>
    %cst_33 = arith.constant 0.000000e+00 : f32
    %44 = vector.broadcast %cst_33 : f32 to vector<16x128xf32>
    %45 = arith.maximumf %43, %44 : vector<16x128xf32>
    %c0_34 = arith.constant 0 : index
    %c0_35 = arith.constant 0 : index
    %c0_36 = arith.constant 0 : index
    %46 = vector.load %arg8[%c0_34, %c0_35, %c0_36] : memref<2x128x128xbf16, #tpu.memory_space<vmem>>, vector<1x128x128xbf16>
    %47 = vector.shape_cast %46 : vector<1x128x128xbf16> to vector<128x128xbf16>
    %48 = arith.truncf %39 : vector<16x128xf32> to vector<16x128xbf16>
    %cst_37 = arith.constant dense<0.000000e+00> : vector<16x128xf32>
    %49 = tpu.matmul %48, %47, %cst_37 {dimension_numbers = #tpu.dot_dimension_numbers<[1], [0], [0], [1], [0, 0, 1, 1], [], []>} : vector<16x128xbf16>, vector<128x128xbf16>, vector<16x128xf32> -> vector<16x128xf32>
    %c1_38 = arith.constant 1 : index
    %c0_39 = arith.constant 0 : index
    %c0_40 = arith.constant 0 : index
    %50 = vector.load %arg8[%c1_38, %c0_39, %c0_40] : memref<2x128x128xbf16, #tpu.memory_space<vmem>>, vector<1x128x128xbf16>
    %51 = vector.shape_cast %50 : vector<1x128x128xbf16> to vector<128x128xbf16>
    %52 = arith.truncf %45 : vector<16x128xf32> to vector<16x128xbf16>
    %cst_41 = arith.constant dense<0.000000e+00> : vector<16x128xf32>
    %53 = tpu.matmul %52, %51, %cst_41 {dimension_numbers = #tpu.dot_dimension_numbers<[1], [0], [0], [1], [0, 0, 1, 1], [], []>} : vector<16x128xbf16>, vector<128x128xbf16>, vector<16x128xf32> -> vector<16x128xf32>
    %54 = arith.addf %49, %53 : vector<16x128xf32>
    %c0_42 = arith.constant 0 : index
    %c0_43 = arith.constant 0 : index
    %55 = vector.load %arg9[%c0_42, %c0_43] : memref<1x128xf32, #tpu.memory_space<vmem>>, vector<1x128xf32>
    %56 = vector.broadcast %55 : vector<1x128xf32> to vector<16x128xf32>
    %57 = arith.addf %54, %56 : vector<16x128xf32>
    %c0_44 = arith.constant 0 : index
    %c0_45 = arith.constant 0 : index
    %58 = vector.load %arg10[%c0_44, %c0_45] : memref<16x128xf32, #tpu.memory_space<vmem>>, vector<16x128xf32>
    tpu.vector_store %arg10[%c0_44, %c0_45], %57 {strides = array<i32>} : memref<16x128xf32, #tpu.memory_space<vmem>>, vector<16x128xf32>,
    return
  }
  func.func @transform_0(%arg0: i32) -> (i32, i32) {
    %c0_i32 = arith.constant 0 : i32
    %c0_i32_0 = arith.constant 0 : i32
    return %arg0, %c0_i32 : i32, i32
  }
  func.func @transform_1(%arg0: i32) -> (i32, i32) {
    %c0_i32 = arith.constant 0 : i32
    %c0_i32_0 = arith.constant 0 : i32
    %c0_i32_1 = arith.constant 0 : i32
    return %c0_i32, %c0_i32_0 : i32, i32
  }
  func.func @transform_2(%arg0: i32) -> (i32, i32) {
    %c0_i32 = arith.constant 0 : i32
    %c0_i32_0 = arith.constant 0 : i32
    %c0_i32_1 = arith.constant 0 : i32
    return %c0_i32, %c0_i32_0 : i32, i32
  }
  func.func @transform_3(%arg0: i32) -> (i32, i32, i32) {
    %c0_i32 = arith.constant 0 : i32
    %c0_i32_0 = arith.constant 0 : i32
    %c0_i32_1 = arith.constant 0 : i32
    %c0_i32_2 = arith.constant 0 : i32
    return %c0_i32, %c0_i32_0, %c0_i32_1 : i32, i32, i32
  }
  func.func @transform_4(%arg0: i32) -> (i32, i32, i32) {
    %c0_i32 = arith.constant 0 : i32
    %c0_i32_0 = arith.constant 0 : i32
    %c0_i32_1 = arith.constant 0 : i32
    %c0_i32_2 = arith.constant 0 : i32
    return %c0_i32, %c0_i32_0, %c0_i32_1 : i32, i32, i32
  }
  func.func @transform_5(%arg0: i32) -> (i32, i32, i32) {
    %c0_i32 = arith.constant 0 : i32
    %c0_i32_0 = arith.constant 0 : i32
    %c0_i32_1 = arith.constant 0 : i32
    %c0_i32_2 = arith.constant 0 : i32
    return %c0_i32, %c0_i32_0, %c0_i32_1 : i32, i32, i32
  }
  func.func @transform_6(%arg0: i32) -> (i32, i32, i32) {
    %c0_i32 = arith.constant 0 : i32
    %c0_i32_0 = arith.constant 0 : i32
    %c0_i32_1 = arith.constant 0 : i32
    %c0_i32_2 = arith.constant 0 : i32
    return %c0_i32, %c0_i32_0, %c0_i32_1 : i32, i32, i32
  }
  func.func @transform_7(%arg0: i32) -> (i32, i32, i32) {
    %c0_i32 = arith.constant 0 : i32
    %c0_i32_0 = arith.constant 0 : i32
    %c0_i32_1 = arith.constant 0 : i32
    %c0_i32_2 = arith.constant 0 : i32
    return %c0_i32, %c0_i32_0, %c0_i32_1 : i32, i32, i32
  }
  func.func @transform_8(%arg0: i32) -> (i32, i32) {
    %c0_i32 = arith.constant 0 : i32
    %c0_i32_0 = arith.constant 0 : i32
    %c0_i32_1 = arith.constant 0 : i32
    return %c0_i32, %c0_i32_0 : i32, i32
  }
  func.func @transform_9(%arg0: i32) -> (i32, i32) {
    %c0_i32 = arith.constant 0 : i32
    %c0_i32_0 = arith.constant 0 : i32
    return %arg0, %c0_i32 : i32, i32
  }
}

</mosaic_0001>

<llo_original>
// kernel: tpu_custom_call.1
$region0: #{tpu_custom_call.1}
  #allocation0 [shape = 'u32[]', space=smem, size = 0x4, offset = 0x4, fixed_abs, tag = 'smem constant byte address 0x4 - core index']
  #allocation1 [shape = 'u32[144,128]{1,0:T(1,128)}', space=vmem, size = 0x12000, scoped, tag = 'internal scratch']
  %s0 = inlined_call_operand.hbm [shape: bf16[16,128], index: 0, kind: input, shape index: {}]
  %s1 = inlined_call_operand.hbm [shape: bf16[128,128], index: 1, kind: input, shape index: {}]
  %s2 = inlined_call_operand.vmem [shape: f32[1,128], index: 2, kind: input, shape index: {}]
  %s3 = inlined_call_operand.hbm [shape: bf16[2,128,128], index: 3, kind: input, shape index: {}]
  %s4 = inlined_call_operand.vmem [shape: f32[2,1,128], index: 4, kind: input, shape index: {}]
  %s5 = inlined_call_operand.hbm [shape: bf16[2,128,128], index: 5, kind: input, shape index: {}]
  %s6 = inlined_call_operand.vmem [shape: f32[2,1,128], index: 6, kind: input, shape index: {}]
  %s7 = inlined_call_operand.hbm [shape: bf16[2,128,128], index: 7, kind: input, shape index: {}]
  %s8 = inlined_call_operand.vmem [shape: f32[1,128], index: 8, kind: input, shape index: {}]
  %s9 = inlined_call_operand.hbm [shape: f32[16,128], index: 9, kind: output, shape index: {}]
  %s10 = sld [smem:[#allocation0]]
  $region66: #{tpu_custom_call.1} parent=0
    _
  %s12 = ssub.s32 1, %s10
  %s13 = scalar_select 0, %s12, %s10
  $region1: #{tpu_custom_call.1} parent=0
    #allocation2 [shape = 'u8[4096]{0}', space=vmem, size = 0x1000, scoped, tag = 'input window, operand 0, single buffered']
    #allocation3 [shape = 's32[1]{0}', space=sflag, size = 0x4, scoped, tag = 'scoped memory for tpu_custom_call.1']
    #allocation4 [shape = 's32[1]{0}', space=sflag, size = 0x4, scoped, tag = 'scoped memory for tpu_custom_call.1']
    #allocation5 [shape = 'u8[32768]{0}', space=vmem, size = 0x8000, scoped, tag = 'input window, operand 1, single buffered']
    #allocation6 [shape = 's32[1]{0}', space=sflag, size = 0x4, scoped, tag = 'scoped memory for tpu_custom_call.1']
    #allocation7 [shape = 'u8[65536]{0}', space=vmem, size = 0x10000, scoped, tag = 'input window, operand 3, single buffered']
    #allocation8 [shape = 'u8[65536]{0}', space=vmem, size = 0x10000, scoped, tag = 'input window, operand 5, single buffered']
    #allocation9 [shape = 's32[1]{0}', space=sflag, size = 0x4, scoped, tag = 'scoped memory for tpu_custom_call.1']
    #allocation10 [shape = 'u8[65536]{0}', space=vmem, size = 0x10000, scoped, tag = 'input window, operand 7, single buffered']
    #allocation11 [shape = 'u8[8192]{0}', space=vmem, size = 0x2000, scoped, tag = 'output window, operand 0, single buffered']
    %14 = vsyncpa [#allocation3], 0
    %15 = vsyncpa [#allocation6], 0
    %16 = vsyncpa [#allocation9], 0
    %17 = vsyncpa [#allocation4], 0
    // Predicated region
    $region2: #{tpu_custom_call.1} parent=1 // pred_check
      _
    $region3: #{tpu_custom_call.1} parent=1 // pred_check_branch
      %19 = sbr.rel (0) target = $region5
    $region4: #{tpu_custom_call.1} parent=1 // pred_region
      %s21 = ssub.s32 128, 128
      %22 = vsyncadd [#allocation3], %s21
      %s23 = sshll.u32 [#allocation2], 4
      %s24 = int_to_ptr.vmem [resolvable:$true] %s23
      %29 = dma.hbm_to_vmem [thread:$0]  %s0, 128, %s24, [#allocation3], 64, 64, 4
    $region5: #{tpu_custom_call.1} parent=1 // pred_fallthru
      _
    // Predicated region
    $region6: #{tpu_custom_call.1} parent=1 // pred_check
      _
    $region7: #{tpu_custom_call.1} parent=1 // pred_check_branch
      %31 = sbr.rel (0) target = $region9
    $region8: #{tpu_custom_call.1} parent=1 // pred_region
      %s33 = ssub.s32 1024, 1024
      %34 = vsyncadd [#allocation6], %s33
      %s35 = sshll.u32 [#allocation5], 4
      %s36 = int_to_ptr.vmem [resolvable:$true] %s35
      %41 = dma.hbm_to_vmem [thread:$0]  %s1, 1024, %s36, [#allocation6], 64, 64, 4
    $region9: #{tpu_custom_call.1} parent=1 // pred_fallthru
      _
    // Predicated region
    $region10: #{tpu_custom_call.1} parent=1 // pred_check
      _
    $region11: #{tpu_custom_call.1} parent=1 // pred_check_branch
      %43 = sbr.rel (0) target = $region13
    $region12: #{tpu_custom_call.1} parent=1 // pred_region
      _
    $region13: #{tpu_custom_call.1} parent=1 // pred_fallthru
      _
    // Predicated region
    $region14: #{tpu_custom_call.1} parent=1 // pred_check
      _
    $region15: #{tpu_custom_call.1} parent=1 // pred_check_branch
      %45 = sbr.rel (0) target = $region17
    $region16: #{tpu_custom_call.1} parent=1 // pred_region
      %s47 = ssub.s32 2048, 2048
      %48 = vsyncadd [#allocation6], %s47
      %s49 = sshll.u32 [#allocation7], 4
      %s50 = int_to_ptr.vmem [resolvable:$true] %s49
      %55 = dma.hbm_to_vmem [thread:$0]  %s3, 2048, %s50, [#allocation6], 64, 64, 4
    $region17: #{tpu_custom_call.1} parent=1 // pred_fallthru
      _
    // Predicated region
    $region18: #{tpu_custom_call.1} parent=1 // pred_check
      _
    $region19: #{tpu_custom_call.1} parent=1 // pred_check_branch
      %57 = sbr.rel (0) target = $region21
    $region20: #{tpu_custom_call.1} parent=1 // pred_region
      _
    $region21: #{tpu_custom_call.1} parent=1 // pred_fallthru
      _
    // Predicated region
    $region22: #{tpu_custom_call.1} parent=1 // pred_check
      _
    $region23: #{tpu_custom_call.1} parent=1 // pred_check_branch
      %59 = sbr.rel (0) target = $region25
    $region24: #{tpu_custom_call.1} parent=1 // pred_region
      %s61 = ssub.s32 2048, 2048
      %62 = vsyncadd [#allocation9], %s61
      %s63 = sshll.u32 [#allocation8], 4
      %s64 = int_to_ptr.vmem [resolvable:$true] %s63
      %69 = dma.hbm_to_vmem [thread:$0]  %s5, 2048, %s64, [#allocation9], 64, 64, 4
    $region25: #{tpu_custom_call.1} parent=1 // pred_fallthru
      _
    // Predicated region
    $region26: #{tpu_custom_call.1} parent=1 // pred_check
      _
    $region27: #{tpu_custom_call.1} parent=1 // pred_check_branch
      %71 = sbr.rel (0) target = $region29
    $region28: #{tpu_custom_call.1} parent=1 // pred_region
      _
    $region29: #{tpu_custom_call.1} parent=1 // pred_fallthru
      _
    // Predicated region
    $region30: #{tpu_custom_call.1} parent=1 // pred_check
      _
    $region31: #{tpu_custom_call.1} parent=1 // pred_check_branch
      %73 = sbr.rel (0) target = $region33
    $region32: #{tpu_custom_call.1} parent=1 // pred_region
      %s75 = ssub.s32 2048, 2048
      %76 = vsyncadd [#allocation9], %s75
      %s77 = sshll.u32 [#allocation10], 4
      %s78 = int_to_ptr.vmem [resolvable:$true] %s77
      %83 = dma.hbm_to_vmem [thread:$0]  %s7, 2048, %s78, [#allocation9], 64, 64, 4
    $region33: #{tpu_custom_call.1} parent=1 // pred_fallthru
      _
    // Predicated region
    $region34: #{tpu_custom_call.1} parent=1 // pred_check
      _
    $region35: #{tpu_custom_call.1} parent=1 // pred_check_branch
      %85 = sbr.rel (0) target = $region37
    $region36: #{tpu_custom_call.1} parent=1 // pred_region
      _
    $region37: #{tpu_custom_call.1} parent=1 // pred_fallthru
      _
    // Predicated region
    $region38: #{tpu_custom_call.1} parent=1 // pred_check
      _
    $region39: #{tpu_custom_call.1} parent=1 // pred_check_branch
      %87 = sbr.rel (0) target = $region41
    $region40: #{tpu_custom_call.1} parent=1 // pred_region
      %88 = dma.done [#allocation3], 128
    $region41: #{tpu_custom_call.1} parent=1 // pred_fallthru
      _
    // Predicated region
    $region42: #{tpu_custom_call.1} parent=1 // pred_check
      _
    $region43: #{tpu_custom_call.1} parent=1 // pred_check_branch
      %90 = sbr.rel (0) target = $region45
    $region44: #{tpu_custom_call.1} parent=1 // pred_region
      %91 = dma.done [#allocation6], 1024
    $region45: #{tpu_custom_call.1} parent=1 // pred_fallthru
      _
    // Predicated region
    $region46: #{tpu_custom_call.1} parent=1 // pred_check
      _
    $region47: #{tpu_custom_call.1} parent=1 // pred_check_branch
      %93 = sbr.rel (0) target = $region49
    $region48: #{tpu_custom_call.1} parent=1 // pred_region
      %94 = dma.done [#allocation6], 2048
    $region49: #{tpu_custom_call.1} parent=1 // pred_fallthru
      _
    // Predicated region
    $region50: #{tpu_custom_call.1} parent=1 // pred_check
      _
    $region51: #{tpu_custom_call.1} parent=1 // pred_check_branch
      %96 = sbr.rel (0) target = $region53
    $region52: #{tpu_custom_call.1} parent=1 // pred_region
      %97 = dma.done [#allocation9], 2048
    $region53: #{tpu_custom_call.1} parent=1 // pred_fallthru
      _
    // Predicated region
    $region54: #{tpu_custom_call.1} parent=1 // pred_check
      _
    $region55: #{tpu_custom_call.1} parent=1 // pred_check_branch
      %99 = sbr.rel (0) target = $region57
    $region56: #{tpu_custom_call.1} parent=1 // pred_region
      %100 = dma.done [#allocation9], 2048
    $region57: #{tpu_custom_call.1} parent=1 // pred_fallthru
      _
    %v102 = vld [vmem:[#allocation2] sm:$0xf]
    %v103 = vld [vmem:[#allocation2 + $0x4] sm:$0xf]
    %v104 = vld [vmem:[#allocation5] sm:$0xf]
    %v105 = vld [vmem:[#allocation5 + $0x4] sm:$0xf]
    %v106 = vld [vmem:[#allocation5 + $0x8] sm:$0xf]
    %v107 = vld [vmem:[#allocation5 + $0xc] sm:$0xf]
    %v108 = vld [vmem:[#allocation5 + $0x10] sm:$0xf]
    %v109 = vld [vmem:[#allocation5 + $0x14] sm:$0xf]
    %v110 = vld [vmem:[#allocation5 + $0x18] sm:$0xf]
    %v111 = vld [vmem:[#allocation5 + $0x1c] sm:$0xf]
    %v112 = vld [vmem:[#allocation5 + $0x20] sm:$0xf]
    %v113 = vld [vmem:[#allocation5 + $0x24] sm:$0xf]
    %v114 = vld [vmem:[#allocation5 + $0x28] sm:$0xf]
    %v115 = vld [vmem:[#allocation5 + $0x2c] sm:$0xf]
    %v116 = vld [vmem:[#allocation5 + $0x30] sm:$0xf]
    %v117 = vld [vmem:[#allocation5 + $0x34] sm:$0xf]
    %v118 = vld [vmem:[#allocation5 + $0x38] sm:$0xf]
    %v119 = vld [vmem:[#allocation5 + $0x3c] sm:$0xf]
    %v120 = vld [vmem:[%s2] sm:$0x1]
    %v122 = vlaneseq
    %v123 = vshrl.u32 %v122, 7
    %v124 = vsub.s32 0, %v123
    %v125 = vrot.slane %v120, %v124
    %v129 = vunpack.c.l.b16 %v102
    %v130 = vunpack.c.l.b16 %v103
    %v131 = vpack.c.b16 %v130, %v129
    %v149 = vunpack.c.l.b16 %v104
    %v150 = vunpack.c.l.b16 %v105
    %v151 = vunpack.c.l.b16 %v106
    %v152 = vunpack.c.l.b16 %v107
    %v153 = vunpack.c.l.b16 %v108
    %v154 = vunpack.c.l.b16 %v109
    %v155 = vunpack.c.l.b16 %v110
    %v156 = vunpack.c.l.b16 %v111
    %v157 = vunpack.c.l.b16 %v112
    %v158 = vunpack.c.l.b16 %v113
    %v159 = vunpack.c.l.b16 %v114
    %v160 = vunpack.c.l.b16 %v115
    %v161 = vunpack.c.l.b16 %v116
    %v162 = vunpack.c.l.b16 %v117
    %v163 = vunpack.c.l.b16 %v118
    %v164 = vunpack.c.l.b16 %v119
    %v165 = vpack.c.b16 %v150, %v149
    %v166 = vpack.c.b16 %v152, %v151
    %v167 = vpack.c.b16 %v154, %v153
    %v168 = vpack.c.b16 %v156, %v155
    %v169 = vpack.c.b16 %v158, %v157
    %v170 = vpack.c.b16 %v160, %v159
    %v171 = vpack.c.b16 %v162, %v161
    %v172 = vpack.c.b16 %v164, %v163
    %181 = vmatprep.subr.bf16.mxu0 0
    %182 = vmatpush1.bf16.msra.mxu0 %v172
    %183 = vmatprep.subr.bf16.mxu0 0
    %184 = vmatpush1.bf16.msra.mxu0 %v171
    %185 = vmatprep.subr.bf16.mxu0 0
    %186 = vmatpush1.bf16.msra.mxu0 %v170
    %187 = vmatprep.subr.bf16.mxu0 0
    %188 = vmatpush1.bf16.msra.mxu0 %v169
    %189 = vmatprep.subr.bf16.mxu0 0
    %190 = vmatpush1.bf16.msra.mxu0 %v168
    %191 = vmatprep.subr.bf16.mxu0 0
    %192 = vmatpush1.bf16.msra.mxu0 %v167
    %193 = vmatprep.subr.bf16.mxu0 0
    %194 = vmatpush1.bf16.msra.mxu0 %v166
    %195 = vmatprep.subr.bf16.mxu0 0
    %196 = vmatpush1.bf16.msra.mxu0 %v165
    %197 = vmatprep.subr.bf16.mxu0 0
    %198 = vmatpush2.bf16.msra.mxu0 0
    %199 = vmatprep.subr.bf16.mxu0 0
    %200 = vmatpush2.bf16.msra.mxu0 0
    %201 = vmatprep.subr.bf16.mxu0 0
    %202 = vmatpush2.bf16.msra.mxu0 0
    %203 = vmatprep.subr.bf16.mxu0 0
    %204 = vmatpush2.bf16.msra.mxu0 0
    %205 = vmatprep.subr.bf16.mxu0 0
    %206 = vmatpush2.bf16.msra.mxu0 0
    %207 = vmatprep.subr.bf16.mxu0 0
    %208 = vmatpush2.bf16.msra.mxu0 0
    %209 = vmatprep.subr.bf16.mxu0 0
    %210 = vmatpush2.bf16.msra.mxu0 0
    %211 = vmatprep.subr.bf16.mxu0 0
    %212 = vmatpush2.bf16.msra.mxu0 0
    %213 = vmatprep.mubr.bf16.mxu0 0
    %214 = vmatmul.mubr.bf16.gmra.mxu0 %v131
    %v215 = vpop.f32.mrf.mxu0
    %v216 = vadd.f32 %v125, %v215
    %v217 = vpop.f32.mrf.mxu0
    %v218 = vpop.f32.mrf.mxu0
    %v219 = vadd.f32 %v125, %v218
    %v220 = vpop.f32.mrf.mxu0
    %221 = vdwg.mxu0
    %v222 = vld [vmem:[#allocation7] sm:$0xf]
    %v223 = vld [vmem:[#allocation7 + $0x4] sm:$0xf]
    %v224 = vld [vmem:[#allocation7 + $0x8] sm:$0xf]
    %v225 = vld [vmem:[#allocation7 + $0xc] sm:$0xf]
    %v226 = vld [vmem:[#allocation7 + $0x10] sm:$0xf]
    %v227 = vld [vmem:[#allocation7 + $0x14] sm:$0xf]
    %v228 = vld [vmem:[#allocation7 + $0x18] sm:$0xf]
    %v229 = vld [vmem:[#allocation7 + $0x1c] sm:$0xf]
    %v230 = vld [vmem:[#allocation7 + $0x20] sm:$0xf]
    %v231 = vld [vmem:[#allocation7 + $0x24] sm:$0xf]
    %v232 = vld [vmem:[#allocation7 + $0x28] sm:$0xf]
    %v233 = vld [vmem:[#allocation7 + $0x2c] sm:$0xf]
    %v234 = vld [vmem:[#allocation7 + $0x30] sm:$0xf]
    %v235 = vld [vmem:[#allocation7 + $0x34] sm:$0xf]
    %v236 = vld [vmem:[#allocation7 + $0x38] sm:$0xf]
    %v237 = vld [vmem:[#allocation7 + $0x3c] sm:$0xf]
    %v238 = vpack.c.bf16 %v219, %v216
    %v239 = vld [vmem:[#allocation8] sm:$0xf]
    %v240 = vld [vmem:[#allocation8 + $0x4] sm:$0xf]
    %v241 = vld [vmem:[#allocation8 + $0x8] sm:$0xf]
    %v242 = vld [vmem:[#allocation8 + $0xc] sm:$0xf]
    %v243 = vld [vmem:[#allocation8 + $0x10] sm:$0xf]
    %v244 = vld [vmem:[#allocation8 + $0x14] sm:$0xf]
    %v245 = vld [vmem:[#allocation8 + $0x18] sm:$0xf]
    %v246 = vld [vmem:[#allocation8 + $0x1c] sm:$0xf]
    %v247 = vld [vmem:[#allocation8 + $0x20] sm:$0xf]
    %v248 = vld [vmem:[#allocation8 + $0x24] sm:$0xf]
    %v249 = vld [vmem:[#allocation8 + $0x28] sm:$0xf]
    %v250 = vld [vmem:[#allocation8 + $0x2c] sm:$0xf]
    %v251 = vld [vmem:[#allocation8 + $0x30] sm:$0xf]
    %v252 = vld [vmem:[#allocation8 + $0x34] sm:$0xf]
    %v253 = vld [vmem:[#allocation8 + $0x38] sm:$0xf]
    %v254 = vld [vmem:[#allocation8 + $0x3c] sm:$0xf]
    %v255 = vld [vmem:[%s4] sm:$0x1]
    %v257 = vlaneseq
    %v258 = vshrl.u32 %v257, 7
    %v259 = vsub.s32 0, %v258
    %v260 = vrot.slane %v255, %v259
    %v278 = vunpack.c.l.b16 %v222
    %v279 = vunpack.c.l.b16 %v223
    %v280 = vunpack.c.l.b16 %v224
    %v281 = vunpack.c.l.b16 %v225
    %v282 = vunpack.c.l.b16 %v226
    %v283 = vunpack.c.l.b16 %v227
    %v284 = vunpack.c.l.b16 %v228
    %v285 = vunpack.c.l.b16 %v229
    %v286 = vunpack.c.l.b16 %v230
    %v287 = vunpack.c.l.b16 %v231
    %v288 = vunpack.c.l.b16 %v232
    %v289 = vunpack.c.l.b16 %v233
    %v290 = vunpack.c.l.b16 %v234
    %v291 = vunpack.c.l.b16 %v235
    %v292 = vunpack.c.l.b16 %v236
    %v293 = vunpack.c.l.b16 %v237
    %v294 = vpack.c.b16 %v279, %v278
    %v295 = vpack.c.b16 %v281, %v280
    %v296 = vpack.c.b16 %v283, %v282
    %v297 = vpack.c.b16 %v285, %v284
    %v298 = vpack.c.b16 %v287, %v286
    %v299 = vpack.c.b16 %v289, %v288
    %v300 = vpack.c.b16 %v291, %v290
    %v301 = vpack.c.b16 %v293, %v292
    %310 = vmatprep.subr.bf16.mxu0 0
    %311 = vmatpush1.bf16.msra.mxu0 %v301
    %312 = vmatprep.subr.bf16.mxu0 0
    %313 = vmatpush1.bf16.msra.mxu0 %v300
    %314 = vmatprep.subr.bf16.mxu0 0
    %315 = vmatpush1.bf16.msra.mxu0 %v299
    %316 = vmatprep.subr.bf16.mxu0 0
    %317 = vmatpush1.bf16.msra.mxu0 %v298
    %318 = vmatprep.subr.bf16.mxu0 0
    %319 = vmatpush1.bf16.msra.mxu0 %v297
    %320 = vmatprep.subr.bf16.mxu0 0
    %321 = vmatpush1.bf16.msra.mxu0 %v296
    %322 = vmatprep.subr.bf16.mxu0 0
    %323 = vmatpush1.bf16.msra.mxu0 %v295
    %324 = vmatprep.subr.bf16.mxu0 0
    %325 = vmatpush1.bf16.msra.mxu0 %v294
    %326 = vmatprep.subr.bf16.mxu0 0
    %327 = vmatpush2.bf16.msra.mxu0 0
    %328 = vmatprep.subr.bf16.mxu0 0
    %329 = vmatpush2.bf16.msra.mxu0 0
    %330 = vmatprep.subr.bf16.mxu0 0
    %331 = vmatpush2.bf16.msra.mxu0 0
    %332 = vmatprep.subr.bf16.mxu0 0
    %333 = vmatpush2.bf16.msra.mxu0 0
    %334 = vmatprep.subr.bf16.mxu0 0
    %335 = vmatpush2.bf16.msra.mxu0 0
    %336 = vmatprep.subr.bf16.mxu0 0
    %337 = vmatpush2.bf16.msra.mxu0 0
    %338 = vmatprep.subr.bf16.mxu0 0
    %339 = vmatpush2.bf16.msra.mxu0 0
    %340 = vmatprep.subr.bf16.mxu0 0
    %341 = vmatpush2.bf16.msra.mxu0 0
    %342 = vmatprep.mubr.bf16.mxu0 0
    %343 = vmatmul.mubr.bf16.gmra.mxu0 %v238
    %v344 = vpop.f32.mrf.mxu0
    %v345 = vadd.f32 %v260, %v344
    %v346 = vpop.f32.mrf.mxu0
    %v347 = vpop.f32.mrf.mxu0
    %v348 = vadd.f32 %v260, %v347
    %v349 = vpop.f32.mrf.mxu0
    %350 = vdwg.mxu0
    %v351 = vmul.f32 %v216, %v345
    %v352 = vmul.f32 %v219, %v348
    %v353 = vadd.f32 %v351, %v216
    %v354 = vadd.f32 %v352, %v219
    %v355 = vld [vmem:[%s6] sm:$0x1]
    %v357 = vlaneseq
    %v358 = vshrl.u32 %v357, 7
    %v359 = vsub.s32 0, %v358
    %v360 = vrot.slane %v355, %v359
    %v378 = vunpack.c.l.b16 %v239
    %v379 = vunpack.c.l.b16 %v240
    %v380 = vunpack.c.l.b16 %v241
    %v381 = vunpack.c.l.b16 %v242
    %v382 = vunpack.c.l.b16 %v243
    %v383 = vunpack.c.l.b16 %v244
    %v384 = vunpack.c.l.b16 %v245
    %v385 = vunpack.c.l.b16 %v246
    %v386 = vunpack.c.l.b16 %v247
    %v387 = vunpack.c.l.b16 %v248
    %v388 = vunpack.c.l.b16 %v249
    %v389 = vunpack.c.l.b16 %v250
    %v390 = vunpack.c.l.b16 %v251
    %v391 = vunpack.c.l.b16 %v252
    %v392 = vunpack.c.l.b16 %v253
    %v393 = vunpack.c.l.b16 %v254
    %v394 = vpack.c.b16 %v379, %v378
    %v395 = vpack.c.b16 %v381, %v380
    %v396 = vpack.c.b16 %v383, %v382
    %v397 = vpack.c.b16 %v385, %v384
    %v398 = vpack.c.b16 %v387, %v386
    %v399 = vpack.c.b16 %v389, %v388
    %v400 = vpack.c.b16 %v391, %v390
    %v401 = vpack.c.b16 %v393, %v392
    %410 = vmatprep.subr.bf16.mxu0 0
    %411 = vmatpush1.bf16.msra.mxu0 %v401
    %412 = vmatprep.subr.bf16.mxu0 0
    %413 = vmatpush1.bf16.msra.mxu0 %v400
    %414 = vmatprep.subr.bf16.mxu0 0
    %415 = vmatpush1.bf16.msra.mxu0 %v399
    %416 = vmatprep.subr.bf16.mxu0 0
    %417 = vmatpush1.bf16.msra.mxu0 %v398
    %418 = vmatprep.subr.bf16.mxu0 0
    %419 = vmatpush1.bf16.msra.mxu0 %v397
    %420 = vmatprep.subr.bf16.mxu0 0
    %421 = vmatpush1.bf16.msra.mxu0 %v396
    %422 = vmatprep.subr.bf16.mxu0 0
    %423 = vmatpush1.bf16.msra.mxu0 %v395
    %424 = vmatprep.subr.bf16.mxu0 0
    %425 = vmatpush1.bf16.msra.mxu0 %v394
    %426 = vmatprep.subr.bf16.mxu0 0
    %427 = vmatpush2.bf16.msra.mxu0 0
    %428 = vmatprep.subr.bf16.mxu0 0
    %429 = vmatpush2.bf16.msra.mxu0 0
    %430 = vmatprep.subr.bf16.mxu0 0
    %431 = vmatpush2.bf16.msra.mxu0 0
    %432 = vmatprep.subr.bf16.mxu0 0
    %433 = vmatpush2.bf16.msra.mxu0 0
    %434 = vmatprep.subr.bf16.mxu0 0
    %435 = vmatpush2.bf16.msra.mxu0 0
    %436 = vmatprep.subr.bf16.mxu0 0
    %437 = vmatpush2.bf16.msra.mxu0 0
    %438 = vmatprep.subr.bf16.mxu0 0
    %439 = vmatpush2.bf16.msra.mxu0 0
    %440 = vmatprep.subr.bf16.mxu0 0
    %441 = vmatpush2.bf16.msra.mxu0 0
    %442 = vmatprep.mubr.bf16.mxu0 0
    %443 = vmatmul.mubr.bf16.gmra.mxu0 %v238
    %v444 = vpop.f32.mrf.mxu0
    %v445 = vadd.f32 %v360, %v444
    %v446 = vpop.f32.mrf.mxu0
    %v447 = vpop.f32.mrf.mxu0
    %v448 = vadd.f32 %v360, %v447
    %v449 = vpop.f32.mrf.mxu0
    %450 = vdwg.mxu0
    %v451 = vmax.f32 %v445, 0.0
    %v452 = vmax.f32 %v448, 0.0
    %s453 = scalar_lea.vmem [#allocation7], 64
    %v454 = vld [vmem:[%s453] sm:$0xf]
    %v455 = vld [vmem:[%s453 + $0x4] sm:$0xf]
    %v456 = vld [vmem:[%s453 + $0x8] sm:$0xf]
    %v457 = vld [vmem:[%s453 + $0xc] sm:$0xf]
    %v458 = vld [vmem:[%s453 + $0x10] sm:$0xf]
    %v459 = vld [vmem:[%s453 + $0x14] sm:$0xf]
    %v460 = vld [vmem:[%s453 + $0x18] sm:$0xf]
    %v461 = vld [vmem:[%s453 + $0x1c] sm:$0xf]
    %v462 = vld [vmem:[%s453 + $0x20] sm:$0xf]
    %v463 = vld [vmem:[%s453 + $0x24] sm:$0xf]
    %v464 = vld [vmem:[%s453 + $0x28] sm:$0xf]
    %v465 = vld [vmem:[%s453 + $0x2c] sm:$0xf]
    %v466 = vld [vmem:[%s453 + $0x30] sm:$0xf]
    %v467 = vld [vmem:[%s453 + $0x34] sm:$0xf]
    %v468 = vld [vmem:[%s453 + $0x38] sm:$0xf]
    %v469 = vld [vmem:[%s453 + $0x3c] sm:$0xf]
    %v470 = vpack.c.bf16 %v354, %v353
    %s471 = scalar_lea.vmem [#allocation8], 64
    %v472 = vld [vmem:[%s471] sm:$0xf]
    %v473 = vld [vmem:[%s471 + $0x4] sm:$0xf]
    %v474 = vld [vmem:[%s471 + $0x8] sm:$0xf]
    %v475 = vld [vmem:[%s471 + $0xc] sm:$0xf]
    %v476 = vld [vmem:[%s471 + $0x10] sm:$0xf]
    %v477 = vld [vmem:[%s471 + $0x14] sm:$0xf]
    %v478 = vld [vmem:[%s471 + $0x18] sm:$0xf]
    %v479 = vld [vmem:[%s471 + $0x1c] sm:$0xf]
    %v480 = vld [vmem:[%s471 + $0x20] sm:$0xf]
    %v481 = vld [vmem:[%s471 + $0x24] sm:$0xf]
    %v482 = vld [vmem:[%s471 + $0x28] sm:$0xf]
    %v483 = vld [vmem:[%s471 + $0x2c] sm:$0xf]
    %v484 = vld [vmem:[%s471 + $0x30] sm:$0xf]
    %v485 = vld [vmem:[%s471 + $0x34] sm:$0xf]
    %v486 = vld [vmem:[%s471 + $0x38] sm:$0xf]
    %v487 = vld [vmem:[%s471 + $0x3c] sm:$0xf]
    %v488 = vpack.c.bf16 %v452, %v451
    %s489 = scalar_lea.vmem %s4, 1
    %v490 = vld [vmem:[%s489] sm:$0x1]
    %v492 = vlaneseq
    %v493 = vshrl.u32 %v492, 7
    %v494 = vsub.s32 0, %v493
    %v495 = vrot.slane %v490, %v494
    %v513 = vunpack.c.l.b16 %v454
    %v514 = vunpack.c.l.b16 %v455
    %v515 = vunpack.c.l.b16 %v456
    %v516 = vunpack.c.l.b16 %v457
    %v517 = vunpack.c.l.b16 %v458
    %v518 = vunpack.c.l.b16 %v459
    %v519 = vunpack.c.l.b16 %v460
    %v520 = vunpack.c.l.b16 %v461
    %v521 = vunpack.c.l.b16 %v462
    %v522 = vunpack.c.l.b16 %v463
    %v523 = vunpack.c.l.b16 %v464
    %v524 = vunpack.c.l.b16 %v465
    %v525 = vunpack.c.l.b16 %v466
    %v526 = vunpack.c.l.b16 %v467
    %v527 = vunpack.c.l.b16 %v468
    %v528 = vunpack.c.l.b16 %v469
    %v529 = vpack.c.b16 %v514, %v513
    %v530 = vpack.c.b16 %v516, %v515
    %v531 = vpack.c.b16 %v518, %v517
    %v532 = vpack.c.b16 %v520, %v519
    %v533 = vpack.c.b16 %v522, %v521
    %v534 = vpack.c.b16 %v524, %v523
    %v535 = vpack.c.b16 %v526, %v525
    %v536 = vpack.c.b16 %v528, %v527
    %545 = vmatprep.subr.bf16.mxu0 0
    %546 = vmatpush1.bf16.msra.mxu0 %v536
    %547 = vmatprep.subr.bf16.mxu0 0
    %548 = vmatpush1.bf16.msra.mxu0 %v535
    %549 = vmatprep.subr.bf16.mxu0 0
    %550 = vmatpush1.bf16.msra.mxu0 %v534
    %551 = vmatprep.subr.bf16.mxu0 0
    %552 = vmatpush1.bf16.msra.mxu0 %v533
    %553 = vmatprep.subr.bf16.mxu0 0
    %554 = vmatpush1.bf16.msra.mxu0 %v532
    %555 = vmatprep.subr.bf16.mxu0 0
    %556 = vmatpush1.bf16.msra.mxu0 %v531
    %557 = vmatprep.subr.bf16.mxu0 0
    %558 = vmatpush1.bf16.msra.mxu0 %v530
    %559 = vmatprep.subr.bf16.mxu0 0
    %560 = vmatpush1.bf16.msra.mxu0 %v529
    %561 = vmatprep.subr.bf16.mxu0 0
    %562 = vmatpush2.bf16.msra.mxu0 0
    %563 = vmatprep.subr.bf16.mxu0 0
    %564 = vmatpush2.bf16.msra.mxu0 0
    %565 = vmatprep.subr.bf16.mxu0 0
    %566 = vmatpush2.bf16.msra.mxu0 0
    %567 = vmatprep.subr.bf16.mxu0 0
    %568 = vmatpush2.bf16.msra.mxu0 0
    %569 = vmatprep.subr.bf16.mxu0 0
    %570 = vmatpush2.bf16.msra.mxu0 0
    %571 = vmatprep.subr.bf16.mxu0 0
    %572 = vmatpush2.bf16.msra.mxu0 0
    %573 = vmatprep.subr.bf16.mxu0 0
    %574 = vmatpush2.bf16.msra.mxu0 0
    %575 = vmatprep.subr.bf16.mxu0 0
    %576 = vmatpush2.bf16.msra.mxu0 0
    %577 = vmatprep.mubr.bf16.mxu0 0
    %578 = vmatmul.mubr.bf16.gmra.mxu0 %v470
    %v579 = vpop.f32.mrf.mxu0
    %v580 = vadd.f32 %v495, %v579
    %v581 = vpop.f32.mrf.mxu0
    %v582 = vpop.f32.mrf.mxu0
    %v583 = vadd.f32 %v495, %v582
    %v584 = vpop.f32.mrf.mxu0
    %585 = vdwg.mxu0
    %v586 = vmul.f32 %v216, %v580
    %v587 = vmul.f32 %v219, %v583
    %v588 = vadd.f32 %v586, %v353
    %v589 = vadd.f32 %v587, %v354
    %s590 = scalar_lea.vmem %s6, 1
    %v591 = vld [vmem:[%s590] sm:$0x1]
    %v593 = vlaneseq
    %v594 = vshrl.u32 %v593, 7
    %v595 = vsub.s32 0, %v594
    %v596 = vrot.slane %v591, %v595
    %v614 = vunpack.c.l.b16 %v472
    %v615 = vunpack.c.l.b16 %v473
    %v616 = vunpack.c.l.b16 %v474
    %v617 = vunpack.c.l.b16 %v475
    %v618 = vunpack.c.l.b16 %v476
    %v619 = vunpack.c.l.b16 %v477
    %v620 = vunpack.c.l.b16 %v478
    %v621 = vunpack.c.l.b16 %v479
    %v622 = vunpack.c.l.b16 %v480
    %v623 = vunpack.c.l.b16 %v481
    %v624 = vunpack.c.l.b16 %v482
    %v625 = vunpack.c.l.b16 %v483
    %v626 = vunpack.c.l.b16 %v484
    %v627 = vunpack.c.l.b16 %v485
    %v628 = vunpack.c.l.b16 %v486
    %v629 = vunpack.c.l.b16 %v487
    %v630 = vpack.c.b16 %v615, %v614
    %v631 = vpack.c.b16 %v617, %v616
    %v632 = vpack.c.b16 %v619, %v618
    %v633 = vpack.c.b16 %v621, %v620
    %v634 = vpack.c.b16 %v623, %v622
    %v635 = vpack.c.b16 %v625, %v624
    %v636 = vpack.c.b16 %v627, %v626
    %v637 = vpack.c.b16 %v629, %v628
    %646 = vmatprep.subr.bf16.mxu0 0
    %647 = vmatpush1.bf16.msra.mxu0 %v637
    %648 = vmatprep.subr.bf16.mxu0 0
    %649 = vmatpush1.bf16.msra.mxu0 %v636
    %650 = vmatprep.subr.bf16.mxu0 0
    %651 = vmatpush1.bf16.msra.mxu0 %v635
    %652 = vmatprep.subr.bf16.mxu0 0
    %653 = vmatpush1.bf16.msra.mxu0 %v634
    %654 = vmatprep.subr.bf16.mxu0 0
    %655 = vmatpush1.bf16.msra.mxu0 %v633
    %656 = vmatprep.subr.bf16.mxu0 0
    %657 = vmatpush1.bf16.msra.mxu0 %v632
    %658 = vmatprep.subr.bf16.mxu0 0
    %659 = vmatpush1.bf16.msra.mxu0 %v631
    %660 = vmatprep.subr.bf16.mxu0 0
    %661 = vmatpush1.bf16.msra.mxu0 %v630
    %662 = vmatprep.subr.bf16.mxu0 0
    %663 = vmatpush2.bf16.msra.mxu0 0
    %664 = vmatprep.subr.bf16.mxu0 0
    %665 = vmatpush2.bf16.msra.mxu0 0
    %666 = vmatprep.subr.bf16.mxu0 0
    %667 = vmatpush2.bf16.msra.mxu0 0
    %668 = vmatprep.subr.bf16.mxu0 0
    %669 = vmatpush2.bf16.msra.mxu0 0
    %670 = vmatprep.subr.bf16.mxu0 0
    %671 = vmatpush2.bf16.msra.mxu0 0
    %672 = vmatprep.subr.bf16.mxu0 0
    %673 = vmatpush2.bf16.msra.mxu0 0
    %674 = vmatprep.subr.bf16.mxu0 0
    %675 = vmatpush2.bf16.msra.mxu0 0
    %676 = vmatprep.subr.bf16.mxu0 0
    %677 = vmatpush2.bf16.msra.mxu0 0
    %678 = vmatprep.mubr.bf16.mxu0 0
    %679 = vmatmul.mubr.bf16.gmra.mxu0 %v488
    %v680 = vpop.f32.mrf.mxu0
    %v681 = vadd.f32 %v596, %v680
    %v682 = vpop.f32.mrf.mxu0
    %v683 = vpop.f32.mrf.mxu0
    %v684 = vadd.f32 %v596, %v683
    %v685 = vpop.f32.mrf.mxu0
    %686 = vdwg.mxu0
    %v687 = vmax.f32 %v681, 0.0
    %v688 = vmax.f32 %v684, 0.0
    %v689 = vld [vmem:[#allocation10] sm:$0xf]
    %v690 = vld [vmem:[#allocation10 + $0x4] sm:$0xf]
    %v691 = vld [vmem:[#allocation10 + $0x8] sm:$0xf]
    %v692 = vld [vmem:[#allocation10 + $0xc] sm:$0xf]
    %v693 = vld [vmem:[#allocation10 + $0x10] sm:$0xf]
    %v694 = vld [vmem:[#allocation10 + $0x14] sm:$0xf]
    %v695 = vld [vmem:[#allocation10 + $0x18] sm:$0xf]
    %v696 = vld [vmem:[#allocation10 + $0x1c] sm:$0xf]
    %v697 = vld [vmem:[#allocation10 + $0x20] sm:$0xf]
    %v698 = vld [vmem:[#allocation10 + $0x24] sm:$0xf]
    %v699 = vld [vmem:[#allocation10 + $0x28] sm:$0xf]
    %v700 = vld [vmem:[#allocation10 + $0x2c] sm:$0xf]
    %v701 = vld [vmem:[#allocation10 + $0x30] sm:$0xf]
    %v702 = vld [vmem:[#allocation10 + $0x34] sm:$0xf]
    %v703 = vld [vmem:[#allocation10 + $0x38] sm:$0xf]
    %v704 = vld [vmem:[#allocation10 + $0x3c] sm:$0xf]
    %v705 = vpack.c.bf16 %v589, %v588
    %s706 = scalar_lea.vmem [#allocation10], 64
    %v707 = vld [vmem:[%s706] sm:$0xf]
    %v708 = vld [vmem:[%s706 + $0x4] sm:$0xf]
    %v709 = vld [vmem:[%s706 + $0x8] sm:$0xf]
    %v710 = vld [vmem:[%s706 + $0xc] sm:$0xf]
    %v711 = vld [vmem:[%s706 + $0x10] sm:$0xf]
    %v712 = vld [vmem:[%s706 + $0x14] sm:$0xf]
    %v713 = vld [vmem:[%s706 + $0x18] sm:$0xf]
    %v714 = vld [vmem:[%s706 + $0x1c] sm:$0xf]
    %v715 = vld [vmem:[%s706 + $0x20] sm:$0xf]
    %v716 = vld [vmem:[%s706 + $0x24] sm:$0xf]
    %v717 = vld [vmem:[%s706 + $0x28] sm:$0xf]
    %v718 = vld [vmem:[%s706 + $0x2c] sm:$0xf]
    %v719 = vld [vmem:[%s706 + $0x30] sm:$0xf]
    %v720 = vld [vmem:[%s706 + $0x34] sm:$0xf]
    %v721 = vld [vmem:[%s706 + $0x38] sm:$0xf]
    %v722 = vld [vmem:[%s706 + $0x3c] sm:$0xf]
    %v723 = vpack.c.bf16 %v688, %v687
    %v740 = vunpack.c.l.b16 %v707
    %v741 = vunpack.c.l.b16 %v708
    %v742 = vunpack.c.l.b16 %v709
    %v743 = vunpack.c.l.b16 %v710
    %v744 = vunpack.c.l.b16 %v711
    %v745 = vunpack.c.l.b16 %v712
    %v746 = vunpack.c.l.b16 %v713
    %v747 = vunpack.c.l.b16 %v714
    %v748 = vunpack.c.l.b16 %v715
    %v749 = vunpack.c.l.b16 %v716
    %v750 = vunpack.c.l.b16 %v717
    %v751 = vunpack.c.l.b16 %v718
    %v752 = vunpack.c.l.b16 %v719
    %v753 = vunpack.c.l.b16 %v720
    %v754 = vunpack.c.l.b16 %v721
    %v755 = vunpack.c.l.b16 %v722
    %v756 = vpack.c.b16 %v741, %v740
    %v757 = vpack.c.b16 %v743, %v742
    %v758 = vpack.c.b16 %v745, %v744
    %v759 = vpack.c.b16 %v747, %v746
    %v760 = vpack.c.b16 %v749, %v748
    %v761 = vpack.c.b16 %v751, %v750
    %v762 = vpack.c.b16 %v753, %v752
    %v763 = vpack.c.b16 %v755, %v754
    %772 = vmatprep.subr.bf16.mxu0 0
    %773 = vmatpush1.bf16.msra.mxu0 %v763
    %774 = vmatprep.subr.bf16.mxu0 0
    %775 = vmatpush1.bf16.msra.mxu0 %v762
    %776 = vmatprep.subr.bf16.mxu0 0
    %777 = vmatpush1.bf16.msra.mxu0 %v761
    %778 = vmatprep.subr.bf16.mxu0 0
    %779 = vmatpush1.bf16.msra.mxu0 %v760
    %780 = vmatprep.subr.bf16.mxu0 0
    %781 = vmatpush1.bf16.msra.mxu0 %v759
    %782 = vmatprep.subr.bf16.mxu0 0
    %783 = vmatpush1.bf16.msra.mxu0 %v758
    %784 = vmatprep.subr.bf16.mxu0 0
    %785 = vmatpush1.bf16.msra.mxu0 %v757
    %786 = vmatprep.subr.bf16.mxu0 0
    %787 = vmatpush1.bf16.msra.mxu0 %v756
    %788 = vmatprep.subr.bf16.mxu0 0
    %789 = vmatpush2.bf16.msra.mxu0 0
    %790 = vmatprep.subr.bf16.mxu0 0
    %791 = vmatpush2.bf16.msra.mxu0 0
    %792 = vmatprep.subr.bf16.mxu0 0
    %793 = vmatpush2.bf16.msra.mxu0 0
    %794 = vmatprep.subr.bf16.mxu0 0
    %795 = vmatpush2.bf16.msra.mxu0 0
    %796 = vmatprep.subr.bf16.mxu0 0
    %797 = vmatpush2.bf16.msra.mxu0 0
    %798 = vmatprep.subr.bf16.mxu0 0
    %799 = vmatpush2.bf16.msra.mxu0 0
    %800 = vmatprep.subr.bf16.mxu0 0
    %801 = vmatpush2.bf16.msra.mxu0 0
    %802 = vmatprep.subr.bf16.mxu0 0
    %803 = vmatpush2.bf16.msra.mxu0 0
    %804 = vmatprep.mubr.bf16.mxu0 0
    %805 = vmatmul.mubr.bf16.gmra.mxu0 %v723
    %v806 = vpop.f32.mrf.mxu0
    %v807 = vadd.f32 0.0, %v806
    %v808 = vpop.f32.mrf.mxu0
    %v809 = vpop.f32.mrf.mxu0
    %v810 = vadd.f32 0.0, %v809
    %v811 = vpop.f32.mrf.mxu0
    %812 = vdwg.mxu0
    %v829 = vunpack.c.l.b16 %v689
    %v830 = vunpack.c.l.b16 %v690
    %v831 = vunpack.c.l.b16 %v691
    %v832 = vunpack.c.l.b16 %v692
    %v833 = vunpack.c.l.b16 %v693
    %v834 = vunpack.c.l.b16 %v694
    %v835 = vunpack.c.l.b16 %v695
    %v836 = vunpack.c.l.b16 %v696
    %v837 = vunpack.c.l.b16 %v697
    %v838 = vunpack.c.l.b16 %v698
    %v839 = vunpack.c.l.b16 %v699
    %v840 = vunpack.c.l.b16 %v700
    %v841 = vunpack.c.l.b16 %v701
    %v842 = vunpack.c.l.b16 %v702
    %v843 = vunpack.c.l.b16 %v703
    %v844 = vunpack.c.l.b16 %v704
    %v845 = vpack.c.b16 %v830, %v829
    %v846 = vpack.c.b16 %v832, %v831
    %v847 = vpack.c.b16 %v834, %v833
    %v848 = vpack.c.b16 %v836, %v835
    %v849 = vpack.c.b16 %v838, %v837
    %v850 = vpack.c.b16 %v840, %v839
    %v851 = vpack.c.b16 %v842, %v841
    %v852 = vpack.c.b16 %v844, %v843
    %861 = vmatprep.subr.bf16.mxu0 0
    %862 = vmatpush1.bf16.msra.mxu0 %v852
    %863 = vmatprep.subr.bf16.mxu0 0
    %864 = vmatpush1.bf16.msra.mxu0 %v851
    %865 = vmatprep.subr.bf16.mxu0 0
    %866 = vmatpush1.bf16.msra.mxu0 %v850
    %867 = vmatprep.subr.bf16.mxu0 0
    %868 = vmatpush1.bf16.msra.mxu0 %v849
    %869 = vmatprep.subr.bf16.mxu0 0
    %870 = vmatpush1.bf16.msra.mxu0 %v848
    %871 = vmatprep.subr.bf16.mxu0 0
    %872 = vmatpush1.bf16.msra.mxu0 %v847
    %873 = vmatprep.subr.bf16.mxu0 0
    %874 = vmatpush1.bf16.msra.mxu0 %v846
    %875 = vmatprep.subr.bf16.mxu0 0
    %876 = vmatpush1.bf16.msra.mxu0 %v845
    %877 = vmatprep.subr.bf16.mxu0 0
    %878 = vmatpush2.bf16.msra.mxu0 0
    %879 = vmatprep.subr.bf16.mxu0 0
    %880 = vmatpush2.bf16.msra.mxu0 0
    %881 = vmatprep.subr.bf16.mxu0 0
    %882 = vmatpush2.bf16.msra.mxu0 0
    %883 = vmatprep.subr.bf16.mxu0 0
    %884 = vmatpush2.bf16.msra.mxu0 0
    %885 = vmatprep.subr.bf16.mxu0 0
    %886 = vmatpush2.bf16.msra.mxu0 0
    %887 = vmatprep.subr.bf16.mxu0 0
    %888 = vmatpush2.bf16.msra.mxu0 0
    %889 = vmatprep.subr.bf16.mxu0 0
    %890 = vmatpush2.bf16.msra.mxu0 0
    %891 = vmatprep.subr.bf16.mxu0 0
    %892 = vmatpush2.bf16.msra.mxu0 0
    %893 = vmatprep.mubr.bf16.mxu0 0
    %894 = vmatmul.mubr.bf16.gmra.mxu0 %v705
    %v895 = vpop.f32.mrf.mxu0
    %v896 = vadd.f32 %v807, %v895
    %v897 = vpop.f32.mrf.mxu0
    %v898 = vpop.f32.mrf.mxu0
    %v899 = vadd.f32 %v810, %v898
    %v900 = vpop.f32.mrf.mxu0
    %901 = vdwg.mxu0
    %v902 = vld [vmem:[%s8] sm:$0x1]
    %v904 = vlaneseq
    %v905 = vshrl.u32 %v904, 7
    %v906 = vsub.s32 0, %v905
    %v907 = vrot.slane %v902, %v906
    %v909 = vadd.f32 %v896, %v907
    %v910 = vadd.f32 %v899, %v907
    %911 = vst [vmem:[#allocation11] sm:$0xff] %v909
    %912 = vst [vmem:[#allocation11 + $0x8] sm:$0xff] %v910
    // Predicated region
    $region58: #{tpu_custom_call.1} parent=1 // pred_check
      _
    $region59: #{tpu_custom_call.1} parent=1 // pred_check_branch
      %914 = sbr.rel (0) target = $region61
    $region60: #{tpu_custom_call.1} parent=1 // pred_region
      %s916 = ssub.s32 256, 256
      %917 = vsyncadd [#allocation4], %s916
      %s918 = sshll.u32 [#allocation11], 4
      %s919 = int_to_ptr.vmem [resolvable:$true] %s918
      %924 = dma.vmem_to_hbm [thread:$0]  %s919, 256, %s9, [#allocation4], 128, 128, 8
    $region61: #{tpu_custom_call.1} parent=1 // pred_fallthru
      _
    // Predicated region
    $region62: #{tpu_custom_call.1} parent=1 // pred_check
      _
    $region63: #{tpu_custom_call.1} parent=1 // pred_check_branch
      %926 = sbr.rel (0) target = $region65
    $region64: #{tpu_custom_call.1} parent=1 // pred_region
      %927 = dma.done [#allocation4], 256
    $region65: #{tpu_custom_call.1} parent=1 // pred_fallthru
      _
    %928 = vsyncpa [#allocation3], 1
    %929 = vsyncpa [#allocation6], 1
    %930 = vsyncpa [#allocation9], 1
    %931 = vsyncpa [#allocation4], 1

</llo_original>
